<compile_context>
chip_gen: v7x
topology: tpu7x:2x2x1
jax: 0.10.0
libtpu: 0.0.40
codegen_flags: <defaults>
</compile_context>

<pallas_src>
import functools

import jax
import jax.numpy as jnp
from jax.experimental import pallas as pl
from jax.experimental.pallas import tpu as pltpu

HIDDEN = 256
LOG_STD_MIN = -20.0
LOG_STD_MAX = 2.0
NORM_EPS = 1e-8

# TODO(synk): for acting-time (B<=256) latency, keep the prepared weights
# VMEM-resident across calls via the cross-call semaphore+VMEM-output pattern
# (P10) so only the (tile_b, state_dim) activation is DMA'd per step; and if
# large-B profiling shows HBM-write bound, store the fused head slab in bf16.


def _round_up(x, m):
    return (x + m - 1) // m * m


def _choose_tiling(batch):
    """Pick (tile_b, grid_n) for the 1-D batch grid."""
    if batch <= 512:
        # Single exact block: block dim == full array dim, so no padding and
        # no multiple-of-8 requirement; one grid step, weights DMA'd once.
        return batch, 1
    # Split into >=2 tiles so v7x's two TensorCores both get work; cap the
    # tile at 1024 rows.  The last block may be ragged (Pallas masks it).
    tile = min(1024, _round_up(pl.cdiv(batch, 2), 8))
    return tile, pl.cdiv(batch, tile)


def _actor_kernel(half, log_std_min, log_std_max,
                  x_ref, w1_ref, b1_ref, w2_ref, b2_ref, wh_ref, bh_ref,
                  out_ref):
    # Matmuls run in the weights' dtype (bf16 by default) with f32
    # accumulation; bias add / relu / clip stay in f32.
    w1 = w1_ref[...]
    x = x_ref[...].astype(w1.dtype)
    h1 = jnp.maximum(
        jnp.dot(x, w1, preferred_element_type=jnp.float32) + b1_ref[...], 0.0)
    w2 = w2_ref[...]
    h2 = jnp.maximum(
        jnp.dot(h1.astype(w2.dtype), w2, preferred_element_type=jnp.float32)
        + b2_ref[...], 0.0)
    # Fused heads: lanes [0, half) = mean, lanes [half, 2*half) = log_std.
    wh = wh_ref[...]
    head = jnp.dot(h2.astype(wh.dtype), wh,
                   preferred_element_type=jnp.float32) + bh_ref[...]
    col = jax.lax.broadcasted_iota(jnp.int32, head.shape, 1)
    clipped = jnp.clip(head, log_std_min, log_std_max)
    # Single lane-dense (tile_b, 2*half) store; mean half untouched,
    # log_std half clamped.
    out_ref[...] = jnp.where(col >= half, clipped, head)


def prepare_actor_params(params, *, compute_dtype=jnp.bfloat16):
    """One-time parameter preparation (hoisted out of the per-step path):
    folds eval-mode RunningMeanStd normalization into fc1, fuses the mean /
    log_std heads into one lane-dense 128-padded slab, and casts the matmul
    weights to `compute_dtype` (biases stay f32)."""
    state_dim, hidden = params["w1"].shape
    action_dim = params["wm"].shape[1]

    # Fold (state - mean) * rsqrt(var + eps) into fc1.
    scale = jax.lax.rsqrt(params["run_var"] + NORM_EPS)           # (1, state_dim)
    w1 = params["w1"] * scale.reshape(state_dim, 1)               # (state_dim, hidden)
    b1 = params["b1"] - (params["run_mean"] * scale) @ params["w1"]

    # Fuse the mean / log_std heads into one 128-lane-padded weight.
    half = _round_up(max(action_dim, 1), 64)                      # 64 for action_dim<=64
    head_pad = 2 * half                                           # multiple of 128
    wh = jnp.zeros((hidden, head_pad), jnp.float32)
    wh = wh.at[:, :action_dim].set(params["wm"])
    wh = wh.at[:, half:half + action_dim].set(params["ws"])
    bh = jnp.zeros((1, head_pad), jnp.float32)
    bh = bh.at[:, :action_dim].set(params["bm"])
    bh = bh.at[:, half:half + action_dim].set(params["bs"])

    return {
        "w1": w1.astype(compute_dtype),
        "b1": b1,
        "w2": params["w2"].astype(compute_dtype),
        "b2": params["b2"],
        "wh": wh.astype(compute_dtype),
        "bh": bh,
    }


def actor_forward(state, prepped, *, action_dim,
                  log_std_min=LOG_STD_MIN, log_std_max=LOG_STD_MAX):
    """state: (B, state_dim) f32; prepped: output of prepare_actor_params.
    Returns (mean, logstd), both (B, action_dim) f32."""
    batch, state_dim = state.shape
    hidden = prepped["w1"].shape[1]
    head_pad = prepped["wh"].shape[1]
    half = head_pad // 2

    tile_b, grid_n = _choose_tiling(batch)

    kernel = functools.partial(_actor_kernel, half, log_std_min, log_std_max)

    def resident(shape):
        # Same block every grid step -> DMA'd once, stays VMEM-resident.
        return pl.BlockSpec(shape, lambda i: (0, 0))

    out = pl.pallas_call(
        kernel,
        out_shape=jax.ShapeDtypeStruct((batch, head_pad), jnp.float32),
        grid=(grid_n,),
        in_specs=[
            pl.BlockSpec((tile_b, state_dim), lambda i: (i, 0)),   # streamed state
            resident((state_dim, hidden)),                         # w1 (norm folded)
            resident((1, hidden)),                                 # b1 (norm folded)
            resident((hidden, hidden)),                            # w2
            resident((1, hidden)),                                 # b2
            resident((hidden, head_pad)),                          # fused head weight
            resident((1, head_pad)),                               # fused head bias
        ],
        out_specs=pl.BlockSpec((tile_b, head_pad), lambda i: (i, 0)),
        compiler_params=pltpu.CompilerParams(
            dimension_semantics=("parallel",)),
    )(state, prepped["w1"], prepped["b1"], prepped["w2"], prepped["b2"],
      prepped["wh"], prepped["bh"])

    mean = out[:, :action_dim]
    logstd = out[:, half:half + action_dim]
    return mean, logstd


def _orthogonal(key, shape, gain):
    # Deterministic orthogonal init (mirrors nn.init.orthogonal_).
    return jax.nn.initializers.orthogonal(scale=gain)(key, shape, jnp.float32)


def make_actor_params(key, state_dim, action_dim):
    k1, k2, k3, k4 = jax.random.split(key, 4)
    gain_relu = jnp.sqrt(2.0)  # buggy `or`/`and` in torch init => relu gain everywhere
    return {
        # PyTorch Linear weight is (out, in); store transposed (in, out) for x @ W.
        "w1": _orthogonal(k1, (HIDDEN, state_dim), gain_relu).T,
        "b1": jnp.zeros((1, HIDDEN), jnp.float32),
        "w2": _orthogonal(k2, (HIDDEN, HIDDEN), gain_relu).T,
        "b2": jnp.zeros((1, HIDDEN), jnp.float32),
        "wm": _orthogonal(k3, (action_dim, HIDDEN), gain_relu).T,
        "bm": jnp.zeros((1, action_dim), jnp.float32),
        "ws": _orthogonal(k4, (action_dim, HIDDEN), gain_relu).T,
        "bs": jnp.zeros((1, action_dim), jnp.float32),
        # RunningMeanStd buffers (fresh): mean=0, var=1.
        "run_mean": jnp.zeros((1, state_dim), jnp.float32),
        "run_var": jnp.ones((1, state_dim), jnp.float32),
    }


def actor_forward_ref(state, params):
    # Pure-JAX f32 reference reproducing the original (un-folded, un-fused) forward.
    x = (state - params["run_mean"]) * jax.lax.rsqrt(params["run_var"] + NORM_EPS)
    h1 = jnp.maximum(x @ params["w1"] + params["b1"], 0.0)
    h2 = jnp.maximum(h1 @ params["w2"] + params["b2"], 0.0)
    mean = h2 @ params["wm"] + params["bm"]
    logstd = jnp.clip(h2 @ params["ws"] + params["bs"], LOG_STD_MIN, LOG_STD_MAX)
    return mean, logstd


if __name__ == "__main__":
    key = jax.random.PRNGKey(0)
    k_param, k_s1, k_s2, k_s3 = jax.random.split(key, 4)

    state_dim = 16
    action_dim = 8
    params = make_actor_params(k_param, state_dim, action_dim)

    # One-time prep (fold + fuse + cast), reused across all forward calls.
    prep_bf16 = prepare_actor_params(params)                           # default bf16
    prep_f32 = prepare_actor_params(params, compute_dtype=jnp.float32)

    fwd = jax.jit(actor_forward, static_argnames=("action_dim",))

    def check(batch, k_state, prepped, atol, rtol):
        state = jax.random.normal(k_state, (batch, state_dim), jnp.float32)
        mean, logstd = fwd(state, prepped, action_dim=action_dim)
        jax.block_until_ready((mean, logstd))
        mean_ref, logstd_ref = actor_forward_ref(state, params)
        assert mean.shape == (batch, action_dim)
        assert logstd.shape == (batch, action_dim)
        assert jnp.allclose(mean, mean_ref, atol=atol, rtol=rtol), \
            float(jnp.abs(mean - mean_ref).max())
        assert jnp.allclose(logstd, logstd_ref, atol=atol, rtol=rtol), \
            float(jnp.abs(logstd - logstd_ref).max())

    # f32 compute path: validates kernel structure at tight tolerance.
    check(8, k_s1, prep_f32, 5e-4, 5e-4)      # tiny batch, single exact block
    check(300, k_s2, prep_f32, 5e-4, 5e-4)    # non-multiple-of-8 batch, no padding
    # bf16 compute path (default, MXU-native): looser tolerance vs f32 reference.
    check(8, k_s1, prep_bf16, 5e-2, 5e-2)
    check(300, k_s2, prep_bf16, 5e-2, 5e-2)
    check(600, k_s3, prep_bf16, 5e-2, 5e-2)   # 2-tile grid with ragged last block

    print("KERNEL_OK")
</pallas_src>

<mosaic_0001>
module attributes {stable_mosaic.version = 11 : i64} {
  func.func @_actor_kernel(%arg0: i32, %arg1: memref<8x16xf32, #tpu.memory_space<vmem>>, %arg2: memref<16x256xf32, #tpu.memory_space<vmem>>, %arg3: memref<1x256xf32, #tpu.memory_space<vmem>>, %arg4: memref<256x256xf32, #tpu.memory_space<vmem>>, %arg5: memref<1x256xf32, #tpu.memory_space<vmem>>, %arg6: memref<256x128xf32, #tpu.memory_space<vmem>>, %arg7: memref<1x128xf32, #tpu.memory_space<vmem>>, %arg8: memref<8x128xf32, #tpu.memory_space<vmem>>) attributes {dimension_semantics = [#tpu.dimension_semantics<parallel>], iteration_bounds = array<i64: 1>, scalar_prefetch = 0 : i64, scratch_operands = 0 : i64, tpu.core_type = #tpu.core_type<tc>, window_params = [{transform_indices = @transform_0, window_bounds = array<i64: 8, 16>}, {pipeline_mode = #tpu.pipeline_mode<synchronous>, transform_indices = @transform_1, window_bounds = array<i64: 16, 256>}, {pipeline_mode = #tpu.pipeline_mode<synchronous>, transform_indices = @transform_2, window_bounds = array<i64: 1, 256>}, {pipeline_mode = #tpu.pipeline_mode<synchronous>, transform_indices = @transform_3, window_bounds = array<i64: 256, 256>}, {pipeline_mode = #tpu.pipeline_mode<synchronous>, transform_indices = @transform_4, window_bounds = array<i64: 1, 256>}, {pipeline_mode = #tpu.pipeline_mode<synchronous>, transform_indices = @transform_5, window_bounds = array<i64: 256, 128>}, {pipeline_mode = #tpu.pipeline_mode<synchronous>, transform_indices = @transform_6, window_bounds = array<i64: 1, 128>}, {transform_indices = @transform_7, window_bounds = array<i64: 8, 128>}]} {
    %c0 = arith.constant 0 : index
    %c0_0 = arith.constant 0 : index
    %0 = vector.load %arg2[%c0, %c0_0] : memref<16x256xf32, #tpu.memory_space<vmem>>, vector<16x256xf32>
    %c0_1 = arith.constant 0 : index
    %c0_2 = arith.constant 0 : index
    %1 = vector.load %arg1[%c0_1, %c0_2] : memref<8x16xf32, #tpu.memory_space<vmem>>, vector<8x16xf32>
    %cst = arith.constant dense<0.000000e+00> : vector<8x256xf32>
    %2 = tpu.matmul %1, %0, %cst {dimension_numbers = #tpu.dot_dimension_numbers<[1], [0], [0], [1], [0, 0, 1, 1], [], []>} : vector<8x16xf32>, vector<16x256xf32>, vector<8x256xf32> -> vector<8x256xf32>
    %c0_3 = arith.constant 0 : index
    %c0_4 = arith.constant 0 : index
    %3 = vector.load %arg3[%c0_3, %c0_4] : memref<1x256xf32, #tpu.memory_space<vmem>>, vector<1x256xf32>
    %4 = vector.broadcast %3 : vector<1x256xf32> to vector<8x256xf32>
    %5 = arith.addf %2, %4 : vector<8x256xf32>
    %cst_5 = arith.constant 0.000000e+00 : f32
    %6 = vector.broadcast %cst_5 : f32 to vector<8x256xf32>
    %7 = arith.maximumf %5, %6 : vector<8x256xf32>
    %c0_6 = arith.constant 0 : index
    %c0_7 = arith.constant 0 : index
    %8 = vector.load %arg4[%c0_6, %c0_7] : memref<256x256xf32, #tpu.memory_space<vmem>>, vector<256x256xf32>
    %cst_8 = arith.constant dense<0.000000e+00> : vector<8x256xf32>
    %9 = tpu.matmul %7, %8, %cst_8 {dimension_numbers = #tpu.dot_dimension_numbers<[1], [0], [0], [1], [0, 0, 1, 1], [], []>} : vector<8x256xf32>, vector<256x256xf32>, vector<8x256xf32> -> vector<8x256xf32>
    %c0_9 = arith.constant 0 : index
    %c0_10 = arith.constant 0 : index
    %10 = vector.load %arg5[%c0_9, %c0_10] : memref<1x256xf32, #tpu.memory_space<vmem>>, vector<1x256xf32>
    %11 = vector.broadcast %10 : vector<1x256xf32> to vector<8x256xf32>
    %12 = arith.addf %9, %11 : vector<8x256xf32>
    %cst_11 = arith.constant 0.000000e+00 : f32
    %13 = vector.broadcast %cst_11 : f32 to vector<8x256xf32>
    %14 = arith.maximumf %12, %13 : vector<8x256xf32>
    %c0_12 = arith.constant 0 : index
    %c0_13 = arith.constant 0 : index
    %15 = vector.load %arg6[%c0_12, %c0_13] : memref<256x128xf32, #tpu.memory_space<vmem>>, vector<256x128xf32>
    %cst_14 = arith.constant dense<0.000000e+00> : vector<8x128xf32>
    %16 = tpu.matmul %14, %15, %cst_14 {dimension_numbers = #tpu.dot_dimension_numbers<[1], [0], [0], [1], [0, 0, 1, 1], [], []>} : vector<8x256xf32>, vector<256x128xf32>, vector<8x128xf32> -> vector<8x128xf32>
    %c0_15 = arith.constant 0 : index
    %c0_16 = arith.constant 0 : index
    %17 = vector.load %arg7[%c0_15, %c0_16] : memref<1x128xf32, #tpu.memory_space<vmem>>, vector<1x128xf32>
    %18 = vector.broadcast %17 : vector<1x128xf32> to vector<8x128xf32>
    %19 = arith.addf %16, %18 : vector<8x128xf32>
    %20 = tpu.iota {dimensions = array<i32: 1>} : vector<8x128xi32>
    %cst_17 = arith.constant -2.000000e+01 : f32
    %cst_18 = arith.constant 2.000000e+00 : f32
    %21 = vector.broadcast %cst_17 : f32 to vector<8x128xf32>
    %22 = arith.maximumf %21, %19 : vector<8x128xf32>
    %23 = vector.broadcast %cst_18 : f32 to vector<8x128xf32>
    %24 = arith.minimumf %23, %22 : vector<8x128xf32>
    %c64_i32 = arith.constant 64 : i32
    %25 = vector.broadcast %c64_i32 : i32 to vector<8x128xi32>
    %26 = arith.cmpi sge, %20, %25 : vector<8x128xi32>
    %27 = arith.select %26, %24, %19 : vector<8x128xi1>, vector<8x128xf32>
    %c0_19 = arith.constant 0 : index
    %c0_20 = arith.constant 0 : index
    %28 = vector.load %arg8[%c0_19, %c0_20] : memref<8x128xf32, #tpu.memory_space<vmem>>, vector<8x128xf32>
    tpu.vector_store %arg8[%c0_19, %c0_20], %27 {strides = array<i32>} : memref<8x128xf32, #tpu.memory_space<vmem>>, vector<8x128xf32>,
    return
  }
  func.func @transform_0(%arg0: i32) -> (i32, i32) {
    %c0_i32 = arith.constant 0 : i32
    %c0_i32_0 = arith.constant 0 : i32
    return %arg0, %c0_i32 : i32, i32
  }
  func.func @transform_1(%arg0: i32) -> (i32, i32) {
    %c0_i32 = arith.constant 0 : i32
    %c0_i32_0 = arith.constant 0 : i32
    %c0_i32_1 = arith.constant 0 : i32
    return %c0_i32, %c0_i32_0 : i32, i32
  }
  func.func @transform_2(%arg0: i32) -> (i32, i32) {
    %c0_i32 = arith.constant 0 : i32
    %c0_i32_0 = arith.constant 0 : i32
    %c0_i32_1 = arith.constant 0 : i32
    return %c0_i32, %c0_i32_0 : i32, i32
  }
  func.func @transform_3(%arg0: i32) -> (i32, i32) {
    %c0_i32 = arith.constant 0 : i32
    %c0_i32_0 = arith.constant 0 : i32
    %c0_i32_1 = arith.constant 0 : i32
    return %c0_i32, %c0_i32_0 : i32, i32
  }
  func.func @transform_4(%arg0: i32) -> (i32, i32) {
    %c0_i32 = arith.constant 0 : i32
    %c0_i32_0 = arith.constant 0 : i32
    %c0_i32_1 = arith.constant 0 : i32
    return %c0_i32, %c0_i32_0 : i32, i32
  }
  func.func @transform_5(%arg0: i32) -> (i32, i32) {
    %c0_i32 = arith.constant 0 : i32
    %c0_i32_0 = arith.constant 0 : i32
    %c0_i32_1 = arith.constant 0 : i32
    return %c0_i32, %c0_i32_0 : i32, i32
  }
  func.func @transform_6(%arg0: i32) -> (i32, i32) {
    %c0_i32 = arith.constant 0 : i32
    %c0_i32_0 = arith.constant 0 : i32
    %c0_i32_1 = arith.constant 0 : i32
    return %c0_i32, %c0_i32_0 : i32, i32
  }
  func.func @transform_7(%arg0: i32) -> (i32, i32) {
    %c0_i32 = arith.constant 0 : i32
    %c0_i32_0 = arith.constant 0 : i32
    return %arg0, %c0_i32 : i32, i32
  }
}

</mosaic_0001>

<llo_original>
// kernel: actor_forward.1
$region0: #{actor_forward.1}
  #allocation0 [shape = 'u32[]', space=smem, size = 0x4, offset = 0x4, fixed_abs, tag = 'smem constant byte address 0x4 - core index']
  #allocation1 [shape = 'u32[144,128]{1,0:T(1,128)}', space=vmem, size = 0x12000, scoped, tag = 'internal scratch']
  %s0 = inlined_call_operand.hbm [shape: f32[8,16], index: 0, kind: input, shape index: {}]
  %s1 = inlined_call_operand.hbm [shape: f32[16,256], index: 1, kind: input, shape index: {}]
  %s2 = inlined_call_operand.vmem [shape: f32[1,256], index: 2, kind: input, shape index: {}]
  %s3 = inlined_call_operand.hbm [shape: f32[256,256], index: 3, kind: input, shape index: {}]
  %s4 = inlined_call_operand.vmem [shape: f32[1,256], index: 4, kind: input, shape index: {}]
  %s5 = inlined_call_operand.hbm [shape: f32[256,128], index: 5, kind: input, shape index: {}]
  %s6 = inlined_call_operand.vmem [shape: f32[1,128], index: 6, kind: input, shape index: {}]
  %s7 = inlined_call_operand.vmem [shape: f32[8,128], index: 7, kind: output, shape index: {}]
  %s8 = sld [smem:[#allocation0]]
  $region54: #{actor_forward.1} parent=0
    _
  %s10 = ssub.s32 1, %s8
  %s11 = scalar_select 0, %s10, %s8
  $region1: #{actor_forward.1} parent=0
    #allocation2 [shape = 'u8[4096]{0}', space=vmem, size = 0x1000, scoped, tag = 'input window, operand 0, single buffered']
    #allocation3 [shape = 's32[1]{0}', space=sflag, size = 0x4, scoped, tag = 'scoped memory for actor_forward.1']
    #allocation4 [shape = 'u8[16384]{0}', space=vmem, size = 0x4000, scoped, tag = 'input window, operand 1, single buffered']
    #allocation5 [shape = 's32[1]{0}', space=sflag, size = 0x4, scoped, tag = 'scoped memory for actor_forward.1']
    #allocation6 [shape = 'u8[262144]{0}', space=vmem, size = 0x40000, scoped, tag = 'input window, operand 3, single buffered']
    #allocation7 [shape = 'u8[131072]{0}', space=vmem, size = 0x20000, scoped, tag = 'input window, operand 5, single buffered']
    #allocation8 [shape = 's32[1]{0}', space=sflag, size = 0x4, scoped, tag = 'scoped memory for actor_forward.1']
    %12 = vsyncpa [#allocation3], 0
    %13 = vsyncpa [#allocation5], 0
    %14 = vsyncpa [#allocation8], 0
    // Predicated region
    $region2: #{actor_forward.1} parent=1 // pred_check
      _
    $region3: #{actor_forward.1} parent=1 // pred_check_branch
      %16 = sbr.rel (0) target = $region5
    $region4: #{actor_forward.1} parent=1 // pred_region
      %s18 = ssub.s32 128, 128
      %19 = vsyncadd [#allocation3], %s18
      %s21 = sshll.u32 [#allocation2], 4
      %s22 = int_to_ptr.vmem [resolvable:$true] %s21
      %24 = dma.hbm_to_vmem [thread:$0]  %s0, 128, %s22, [#allocation3]
    $region5: #{actor_forward.1} parent=1 // pred_fallthru
      _
    // Predicated region
    $region6: #{actor_forward.1} parent=1 // pred_check
      _
    $region7: #{actor_forward.1} parent=1 // pred_check_branch
      %26 = sbr.rel (0) target = $region9
    $region8: #{actor_forward.1} parent=1 // pred_region
      %s28 = ssub.s32 512, 512
      %29 = vsyncadd [#allocation5], %s28
      %s30 = sshll.u32 [#allocation4], 4
      %s31 = int_to_ptr.vmem [resolvable:$true] %s30
      %36 = dma.hbm_to_vmem [thread:$0]  %s1, 512, %s31, [#allocation5], 256, 256, 16
    $region9: #{actor_forward.1} parent=1 // pred_fallthru
      _
    // Predicated region
    $region10: #{actor_forward.1} parent=1 // pred_check
      _
    $region11: #{actor_forward.1} parent=1 // pred_check_branch
      %38 = sbr.rel (0) target = $region13
    $region12: #{actor_forward.1} parent=1 // pred_region
      _
    $region13: #{actor_forward.1} parent=1 // pred_fallthru
      _
    // Predicated region
    $region14: #{actor_forward.1} parent=1 // pred_check
      _
    $region15: #{actor_forward.1} parent=1 // pred_check_branch
      %40 = sbr.rel (0) target = $region17
    $region16: #{actor_forward.1} parent=1 // pred_region
      %s42 = ssub.s32 8192, 8192
      %43 = vsyncadd [#allocation5], %s42
      %s44 = sshll.u32 [#allocation6], 4
      %s45 = int_to_ptr.vmem [resolvable:$true] %s44
      %50 = dma.hbm_to_vmem [thread:$0]  %s3, 8192, %s45, [#allocation5], 256, 256, 16
    $region17: #{actor_forward.1} parent=1 // pred_fallthru
      _
    // Predicated region
    $region18: #{actor_forward.1} parent=1 // pred_check
      _
    $region19: #{actor_forward.1} parent=1 // pred_check_branch
      %52 = sbr.rel (0) target = $region21
    $region20: #{actor_forward.1} parent=1 // pred_region
      _
    $region21: #{actor_forward.1} parent=1 // pred_fallthru
      _
    // Predicated region
    $region22: #{actor_forward.1} parent=1 // pred_check
      _
    $region23: #{actor_forward.1} parent=1 // pred_check_branch
      %54 = sbr.rel (0) target = $region25
    $region24: #{actor_forward.1} parent=1 // pred_region
      %s56 = ssub.s32 4096, 4096
      %57 = vsyncadd [#allocation8], %s56
      %s58 = sshll.u32 [#allocation7], 4
      %s59 = int_to_ptr.vmem [resolvable:$true] %s58
      %64 = dma.hbm_to_vmem [thread:$0]  %s5, 4096, %s59, [#allocation8], 128, 128, 8
    $region25: #{actor_forward.1} parent=1 // pred_fallthru
      _
    // Predicated region
    $region26: #{actor_forward.1} parent=1 // pred_check
      _
    $region27: #{actor_forward.1} parent=1 // pred_check_branch
      %66 = sbr.rel (0) target = $region29
    $region28: #{actor_forward.1} parent=1 // pred_region
      _
    $region29: #{actor_forward.1} parent=1 // pred_fallthru
      _
    // Predicated region
    $region30: #{actor_forward.1} parent=1 // pred_check
      _
    $region31: #{actor_forward.1} parent=1 // pred_check_branch
      %68 = sbr.rel (0) target = $region33
    $region32: #{actor_forward.1} parent=1 // pred_region
      %69 = dma.done [#allocation3], 128
    $region33: #{actor_forward.1} parent=1 // pred_fallthru
      _
    // Predicated region
    $region34: #{actor_forward.1} parent=1 // pred_check
      _
    $region35: #{actor_forward.1} parent=1 // pred_check_branch
      %71 = sbr.rel (0) target = $region37
    $region36: #{actor_forward.1} parent=1 // pred_region
      %72 = dma.done [#allocation5], 512
    $region37: #{actor_forward.1} parent=1 // pred_fallthru
      _
    // Predicated region
    $region38: #{actor_forward.1} parent=1 // pred_check
      _
    $region39: #{actor_forward.1} parent=1 // pred_check_branch
      %74 = sbr.rel (0) target = $region41
    $region40: #{actor_forward.1} parent=1 // pred_region
      %75 = dma.done [#allocation5], 8192
    $region41: #{actor_forward.1} parent=1 // pred_fallthru
      _
    // Predicated region
    $region42: #{actor_forward.1} parent=1 // pred_check
      _
    $region43: #{actor_forward.1} parent=1 // pred_check_branch
      %77 = sbr.rel (0) target = $region45
    $region44: #{actor_forward.1} parent=1 // pred_region
      %78 = dma.done [#allocation8], 4096
    $region45: #{actor_forward.1} parent=1 // pred_fallthru
      _
    %v79 = vld [vmem:[#allocation4] sm:$0xff]
    %v80 = vld [vmem:[#allocation4 + $0x8] sm:$0xff]
    %v81 = vld [vmem:[#allocation4 + $0x10] sm:$0xff]
    %v82 = vld [vmem:[#allocation4 + $0x18] sm:$0xff]
    %v83 = vld [vmem:[#allocation2] sm:$0xff]
    %v84 = vld [vmem:[%s2] sm:$0x3]
    %v86 = vlaneseq
    %v87 = vshrl.u32 %v86, 7
    %v88 = vsub.s32 0, %v87
    %v89 = vrot.slane %v84, %v88
    %v90 = vlaneseq
    %v91 = vshrl.u32 %v90, 7
    %v92 = vsub.s32 1, %v91
    %v93 = vrot.slane %v84, %v92
    %vm96 = vcmask 130048
    %v98 = vsel %vm96, %v83, 0
    %100 = vmatprep.subr.mxu0 %v80
    %101 = vmatpush1.msra.mxu0 %v79
    %102 = vmatprep.subr.mxu0 %v82
    %103 = vmatpush1.msra.mxu0 %v81
    %104 = vmatprep.subr.mxu0 0.0
    %105 = vmatpush1.msra.mxu0 0.0
    %106 = vmatprep.subr.mxu0 0.0
    %107 = vmatpush1.msra.mxu0 0.0
    %108 = vmatprep.subr.mxu0 0.0
    %109 = vmatpush1.msra.mxu0 0.0
    %110 = vmatprep.subr.mxu0 0.0
    %111 = vmatpush1.msra.mxu0 0.0
    %112 = vmatprep.subr.mxu0 0.0
    %113 = vmatpush1.msra.mxu0 0.0
    %114 = vmatprep.subr.mxu0 0.0
    %115 = vmatpush1.msra.mxu0 0.0
    %116 = vmatprep.subr.mxu0 0.0
    %117 = vmatpush1.msra.mxu0 0.0
    %118 = vmatprep.subr.mxu0 0.0
    %119 = vmatpush1.msra.mxu0 0.0
    %120 = vmatprep.subr.mxu0 0.0
    %121 = vmatpush1.msra.mxu0 0.0
    %122 = vmatprep.subr.mxu0 0.0
    %123 = vmatpush1.msra.mxu0 0.0
    %124 = vmatprep.subr.mxu0 0.0
    %125 = vmatpush1.msra.mxu0 0.0
    %126 = vmatprep.subr.mxu0 0.0
    %127 = vmatpush1.msra.mxu0 0.0
    %128 = vmatprep.subr.mxu0 0.0
    %129 = vmatpush1.msra.mxu0 0.0
    %130 = vmatprep.subr.mxu0 0.0
    %131 = vmatpush1.msra.mxu0 0.0
    %132 = vmatprep.subr.mxu0 0.0
    %133 = vmatpush1.msra.mxu0 0.0
    %134 = vmatprep.subr.mxu0 0.0
    %135 = vmatpush1.msra.mxu0 0.0
    %136 = vmatprep.subr.mxu0 0.0
    %137 = vmatpush1.msra.mxu0 0.0
    %138 = vmatprep.subr.mxu0 0.0
    %139 = vmatpush1.msra.mxu0 0.0
    %140 = vmatprep.subr.mxu0 0.0
    %141 = vmatpush1.msra.mxu0 0.0
    %142 = vmatprep.subr.mxu0 0.0
    %143 = vmatpush1.msra.mxu0 0.0
    %144 = vmatprep.subr.mxu0 0.0
    %145 = vmatpush1.msra.mxu0 0.0
    %146 = vmatprep.subr.mxu0 0.0
    %147 = vmatpush1.msra.mxu0 0.0
    %148 = vmatprep.subr.mxu0 0.0
    %149 = vmatpush1.msra.mxu0 0.0
    %150 = vmatprep.subr.mxu0 0.0
    %151 = vmatpush1.msra.mxu0 0.0
    %152 = vmatprep.subr.mxu0 0.0
    %153 = vmatpush1.msra.mxu0 0.0
    %154 = vmatprep.subr.mxu0 0.0
    %155 = vmatpush1.msra.mxu0 0.0
    %156 = vmatprep.subr.mxu0 0.0
    %157 = vmatpush1.msra.mxu0 0.0
    %158 = vmatprep.subr.mxu0 0.0
    %159 = vmatpush1.msra.mxu0 0.0
    %160 = vmatprep.subr.mxu0 0.0
    %161 = vmatpush1.msra.mxu0 0.0
    %162 = vmatprep.subr.mxu0 0.0
    %163 = vmatpush1.msra.mxu0 0.0
    %164 = vmatprep.mubr.f32.mxu0 0.0
    %165 = vmatmul.mubr.f32.gmra.mrb[0].mxu0 %v98
    %v166 = vpop.f32.mrb[0].mxu0
    %v167 = vadd.f32 %v89, %v166
    %v168 = vpop.f32.mrb[0].mxu0
    %v169 = vadd.f32 %v93, %v168
    %170 = vdwg.mxu0
    %v171 = vmax.f32 %v167, 0.0
    %v172 = vmax.f32 %v169, 0.0
    %v173 = vld [vmem:[#allocation6] sm:$0xff]
    %v174 = vld [vmem:[#allocation6 + $0x8] sm:$0xff]
    %v175 = vld [vmem:[#allocation6 + $0x10] sm:$0xff]
    %v176 = vld [vmem:[#allocation6 + $0x18] sm:$0xff]
    %v177 = vld [vmem:[#allocation6 + $0x20] sm:$0xff]
    %v178 = vld [vmem:[#allocation6 + $0x28] sm:$0xff]
    %v179 = vld [vmem:[#allocation6 + $0x30] sm:$0xff]
    %v180 = vld [vmem:[#allocation6 + $0x38] sm:$0xff]
    %v181 = vld [vmem:[#allocation6 + $0x40] sm:$0xff]
    %v182 = vld [vmem:[#allocation6 + $0x48] sm:$0xff]
    %v183 = vld [vmem:[#allocation6 + $0x50] sm:$0xff]
    %v184 = vld [vmem:[#allocation6 + $0x58] sm:$0xff]
    %v185 = vld [vmem:[#allocation6 + $0x60] sm:$0xff]
    %v186 = vld [vmem:[#allocation6 + $0x68] sm:$0xff]
    %v187 = vld [vmem:[#allocation6 + $0x70] sm:$0xff]
    %v188 = vld [vmem:[#allocation6 + $0x78] sm:$0xff]
    %v189 = vld [vmem:[#allocation6 + $0x80] sm:$0xff]
    %v190 = vld [vmem:[#allocation6 + $0x88] sm:$0xff]
    %v191 = vld [vmem:[#allocation6 + $0x90] sm:$0xff]
    %v192 = vld [vmem:[#allocation6 + $0x98] sm:$0xff]
    %v193 = vld [vmem:[#allocation6 + $0xa0] sm:$0xff]
    %v194 = vld [vmem:[#allocation6 + $0xa8] sm:$0xff]
    %v195 = vld [vmem:[#allocation6 + $0xb0] sm:$0xff]
    %v196 = vld [vmem:[#allocation6 + $0xb8] sm:$0xff]
    %v197 = vld [vmem:[#allocation6 + $0xc0] sm:$0xff]
    %v198 = vld [vmem:[#allocation6 + $0xc8] sm:$0xff]
    %v199 = vld [vmem:[#allocation6 + $0xd0] sm:$0xff]
    %v200 = vld [vmem:[#allocation6 + $0xd8] sm:$0xff]
    %v201 = vld [vmem:[#allocation6 + $0xe0] sm:$0xff]
    %v202 = vld [vmem:[#allocation6 + $0xe8] sm:$0xff]
    %v203 = vld [vmem:[#allocation6 + $0xf0] sm:$0xff]
    %v204 = vld [vmem:[#allocation6 + $0xf8] sm:$0xff]
    %v205 = vld [vmem:[#allocation6 + $0x100] sm:$0xff]
    %v206 = vld [vmem:[#allocation6 + $0x108] sm:$0xff]
    %v207 = vld [vmem:[#allocation6 + $0x110] sm:$0xff]
    %v208 = vld [vmem:[#allocation6 + $0x118] sm:$0xff]
    %v209 = vld [vmem:[#allocation6 + $0x120] sm:$0xff]
    %v210 = vld [vmem:[#allocation6 + $0x128] sm:$0xff]
    %v211 = vld [vmem:[#allocation6 + $0x130] sm:$0xff]
    %v212 = vld [vmem:[#allocation6 + $0x138] sm:$0xff]
    %v213 = vld [vmem:[#allocation6 + $0x140] sm:$0xff]
    %v214 = vld [vmem:[#allocation6 + $0x148] sm:$0xff]
    %v215 = vld [vmem:[#allocation6 + $0x150] sm:$0xff]
    %v216 = vld [vmem:[#allocation6 + $0x158] sm:$0xff]
    %v217 = vld [vmem:[#allocation6 + $0x160] sm:$0xff]
    %v218 = vld [vmem:[#allocation6 + $0x168] sm:$0xff]
    %v219 = vld [vmem:[#allocation6 + $0x170] sm:$0xff]
    %v220 = vld [vmem:[#allocation6 + $0x178] sm:$0xff]
    %v221 = vld [vmem:[#allocation6 + $0x180] sm:$0xff]
    %v222 = vld [vmem:[#allocation6 + $0x188] sm:$0xff]
    %v223 = vld [vmem:[#allocation6 + $0x190] sm:$0xff]
    %v224 = vld [vmem:[#allocation6 + $0x198] sm:$0xff]
    %v225 = vld [vmem:[#allocation6 + $0x1a0] sm:$0xff]
    %v226 = vld [vmem:[#allocation6 + $0x1a8] sm:$0xff]
    %v227 = vld [vmem:[#allocation6 + $0x1b0] sm:$0xff]
    %v228 = vld [vmem:[#allocation6 + $0x1b8] sm:$0xff]
    %v229 = vld [vmem:[#allocation6 + $0x1c0] sm:$0xff]
    %v230 = vld [vmem:[#allocation6 + $0x1c8] sm:$0xff]
    %v231 = vld [vmem:[#allocation6 + $0x1d0] sm:$0xff]
    %v232 = vld [vmem:[#allocation6 + $0x1d8] sm:$0xff]
    %v233 = vld [vmem:[#allocation6 + $0x1e0] sm:$0xff]
    %v234 = vld [vmem:[#allocation6 + $0x1e8] sm:$0xff]
    %v235 = vld [vmem:[#allocation6 + $0x1f0] sm:$0xff]
    %v236 = vld [vmem:[#allocation6 + $0x1f8] sm:$0xff]
    %v237 = vld [vmem:[%s4] sm:$0x3]
    %v239 = vlaneseq
    %v240 = vshrl.u32 %v239, 7
    %v241 = vsub.s32 0, %v240
    %v242 = vrot.slane %v237, %v241
    %v243 = vlaneseq
    %v244 = vshrl.u32 %v243, 7
    %v245 = vsub.s32 1, %v244
    %v246 = vrot.slane %v237, %v245
    %249 = vmatprep.subr.mxu0 %v174
    %250 = vmatpush1.msra.mxu0 %v173
    %251 = vmatprep.subr.mxu0 %v176
    %252 = vmatpush1.msra.mxu0 %v175
    %253 = vmatprep.subr.mxu0 %v178
    %254 = vmatpush1.msra.mxu0 %v177
    %255 = vmatprep.subr.mxu0 %v180
    %256 = vmatpush1.msra.mxu0 %v179
    %257 = vmatprep.subr.mxu0 %v182
    %258 = vmatpush1.msra.mxu0 %v181
    %259 = vmatprep.subr.mxu0 %v184
    %260 = vmatpush1.msra.mxu0 %v183
    %261 = vmatprep.subr.mxu0 %v186
    %262 = vmatpush1.msra.mxu0 %v185
    %263 = vmatprep.subr.mxu0 %v188
    %264 = vmatpush1.msra.mxu0 %v187
    %265 = vmatprep.subr.mxu0 %v190
    %266 = vmatpush1.msra.mxu0 %v189
    %267 = vmatprep.subr.mxu0 %v192
    %268 = vmatpush1.msra.mxu0 %v191
    %269 = vmatprep.subr.mxu0 %v194
    %270 = vmatpush1.msra.mxu0 %v193
    %271 = vmatprep.subr.mxu0 %v196
    %272 = vmatpush1.msra.mxu0 %v195
    %273 = vmatprep.subr.mxu0 %v198
    %274 = vmatpush1.msra.mxu0 %v197
    %275 = vmatprep.subr.mxu0 %v200
    %276 = vmatpush1.msra.mxu0 %v199
    %277 = vmatprep.subr.mxu0 %v202
    %278 = vmatpush1.msra.mxu0 %v201
    %279 = vmatprep.subr.mxu0 %v204
    %280 = vmatpush1.msra.mxu0 %v203
    %281 = vmatprep.subr.mxu0 %v206
    %282 = vmatpush1.msra.mxu0 %v205
    %283 = vmatprep.subr.mxu0 %v208
    %284 = vmatpush1.msra.mxu0 %v207
    %285 = vmatprep.subr.mxu0 %v210
    %286 = vmatpush1.msra.mxu0 %v209
    %287 = vmatprep.subr.mxu0 %v212
    %288 = vmatpush1.msra.mxu0 %v211
    %289 = vmatprep.subr.mxu0 %v214
    %290 = vmatpush1.msra.mxu0 %v213
    %291 = vmatprep.subr.mxu0 %v216
    %292 = vmatpush1.msra.mxu0 %v215
    %293 = vmatprep.subr.mxu0 %v218
    %294 = vmatpush1.msra.mxu0 %v217
    %295 = vmatprep.subr.mxu0 %v220
    %296 = vmatpush1.msra.mxu0 %v219
    %297 = vmatprep.subr.mxu0 %v222
    %298 = vmatpush1.msra.mxu0 %v221
    %299 = vmatprep.subr.mxu0 %v224
    %300 = vmatpush1.msra.mxu0 %v223
    %301 = vmatprep.subr.mxu0 %v226
    %302 = vmatpush1.msra.mxu0 %v225
    %303 = vmatprep.subr.mxu0 %v228
    %304 = vmatpush1.msra.mxu0 %v227
    %305 = vmatprep.subr.mxu0 %v230
    %306 = vmatpush1.msra.mxu0 %v229
    %307 = vmatprep.subr.mxu0 %v232
    %308 = vmatpush1.msra.mxu0 %v231
    %309 = vmatprep.subr.mxu0 %v234
    %310 = vmatpush1.msra.mxu0 %v233
    %311 = vmatprep.subr.mxu0 %v236
    %312 = vmatpush1.msra.mxu0 %v235
    %313 = vmatprep.mubr.f32.mxu0 %v172
    %314 = vmatmul.mubr.f32.gmra.mrb[0].mxu0 %v171
    %v315 = vpop.f32.mrb[0].mxu0
    %v316 = vadd.f32 %v242, %v315
    %v317 = vpop.f32.mrb[0].mxu0
    %v318 = vadd.f32 %v246, %v317
    %319 = vdwg.mxu0
    %v320 = vmax.f32 %v316, 0.0
    %v321 = vmax.f32 %v318, 0.0
    %v322 = vld [vmem:[#allocation7] sm:$0xff]
    %v323 = vld [vmem:[#allocation7 + $0x8] sm:$0xff]
    %v324 = vld [vmem:[#allocation7 + $0x10] sm:$0xff]
    %v325 = vld [vmem:[#allocation7 + $0x18] sm:$0xff]
    %v326 = vld [vmem:[#allocation7 + $0x20] sm:$0xff]
    %v327 = vld [vmem:[#allocation7 + $0x28] sm:$0xff]
    %v328 = vld [vmem:[#allocation7 + $0x30] sm:$0xff]
    %v329 = vld [vmem:[#allocation7 + $0x38] sm:$0xff]
    %v330 = vld [vmem:[#allocation7 + $0x40] sm:$0xff]
    %v331 = vld [vmem:[#allocation7 + $0x48] sm:$0xff]
    %v332 = vld [vmem:[#allocation7 + $0x50] sm:$0xff]
    %v333 = vld [vmem:[#allocation7 + $0x58] sm:$0xff]
    %v334 = vld [vmem:[#allocation7 + $0x60] sm:$0xff]
    %v335 = vld [vmem:[#allocation7 + $0x68] sm:$0xff]
    %v336 = vld [vmem:[#allocation7 + $0x70] sm:$0xff]
    %v337 = vld [vmem:[#allocation7 + $0x78] sm:$0xff]
    %v338 = vld [vmem:[#allocation7 + $0x80] sm:$0xff]
    %v339 = vld [vmem:[#allocation7 + $0x88] sm:$0xff]
    %v340 = vld [vmem:[#allocation7 + $0x90] sm:$0xff]
    %v341 = vld [vmem:[#allocation7 + $0x98] sm:$0xff]
    %v342 = vld [vmem:[#allocation7 + $0xa0] sm:$0xff]
    %v343 = vld [vmem:[#allocation7 + $0xa8] sm:$0xff]
    %v344 = vld [vmem:[#allocation7 + $0xb0] sm:$0xff]
    %v345 = vld [vmem:[#allocation7 + $0xb8] sm:$0xff]
    %v346 = vld [vmem:[#allocation7 + $0xc0] sm:$0xff]
    %v347 = vld [vmem:[#allocation7 + $0xc8] sm:$0xff]
    %v348 = vld [vmem:[#allocation7 + $0xd0] sm:$0xff]
    %v349 = vld [vmem:[#allocation7 + $0xd8] sm:$0xff]
    %v350 = vld [vmem:[#allocation7 + $0xe0] sm:$0xff]
    %v351 = vld [vmem:[#allocation7 + $0xe8] sm:$0xff]
    %v352 = vld [vmem:[#allocation7 + $0xf0] sm:$0xff]
    %v353 = vld [vmem:[#allocation7 + $0xf8] sm:$0xff]
    %v354 = vld [vmem:[%s6] sm:$0x1]
    %v356 = vlaneseq
    %v357 = vshrl.u32 %v356, 7
    %v358 = vsub.s32 0, %v357
    %v359 = vrot.slane %v354, %v358
    %361 = vmatprep.subr.mxu0 0.0
    %362 = vmatpush1.msra.mxu0 %v322
    %363 = vmatprep.subr.mxu0 0.0
    %364 = vmatpush1.msra.mxu0 %v323
    %365 = vmatprep.subr.mxu0 0.0
    %366 = vmatpush1.msra.mxu0 %v324
    %367 = vmatprep.subr.mxu0 0.0
    %368 = vmatpush1.msra.mxu0 %v325
    %369 = vmatprep.subr.mxu0 0.0
    %370 = vmatpush1.msra.mxu0 %v326
    %371 = vmatprep.subr.mxu0 0.0
    %372 = vmatpush1.msra.mxu0 %v327
    %373 = vmatprep.subr.mxu0 0.0
    %374 = vmatpush1.msra.mxu0 %v328
    %375 = vmatprep.subr.mxu0 0.0
    %376 = vmatpush1.msra.mxu0 %v329
    %377 = vmatprep.subr.mxu0 0.0
    %378 = vmatpush1.msra.mxu0 %v330
    %379 = vmatprep.subr.mxu0 0.0
    %380 = vmatpush1.msra.mxu0 %v331
    %381 = vmatprep.subr.mxu0 0.0
    %382 = vmatpush1.msra.mxu0 %v332
    %383 = vmatprep.subr.mxu0 0.0
    %384 = vmatpush1.msra.mxu0 %v333
    %385 = vmatprep.subr.mxu0 0.0
    %386 = vmatpush1.msra.mxu0 %v334
    %387 = vmatprep.subr.mxu0 0.0
    %388 = vmatpush1.msra.mxu0 %v335
    %389 = vmatprep.subr.mxu0 0.0
    %390 = vmatpush1.msra.mxu0 %v336
    %391 = vmatprep.subr.mxu0 0.0
    %392 = vmatpush1.msra.mxu0 %v337
    %393 = vmatprep.subr.mxu0 0.0
    %394 = vmatpush1.msra.mxu0 %v338
    %395 = vmatprep.subr.mxu0 0.0
    %396 = vmatpush1.msra.mxu0 %v339
    %397 = vmatprep.subr.mxu0 0.0
    %398 = vmatpush1.msra.mxu0 %v340
    %399 = vmatprep.subr.mxu0 0.0
    %400 = vmatpush1.msra.mxu0 %v341
    %401 = vmatprep.subr.mxu0 0.0
    %402 = vmatpush1.msra.mxu0 %v342
    %403 = vmatprep.subr.mxu0 0.0
    %404 = vmatpush1.msra.mxu0 %v343
    %405 = vmatprep.subr.mxu0 0.0
    %406 = vmatpush1.msra.mxu0 %v344
    %407 = vmatprep.subr.mxu0 0.0
    %408 = vmatpush1.msra.mxu0 %v345
    %409 = vmatprep.subr.mxu0 0.0
    %410 = vmatpush1.msra.mxu0 %v346
    %411 = vmatprep.subr.mxu0 0.0
    %412 = vmatpush1.msra.mxu0 %v347
    %413 = vmatprep.subr.mxu0 0.0
    %414 = vmatpush1.msra.mxu0 %v348
    %415 = vmatprep.subr.mxu0 0.0
    %416 = vmatpush1.msra.mxu0 %v349
    %417 = vmatprep.subr.mxu0 0.0
    %418 = vmatpush1.msra.mxu0 %v350
    %419 = vmatprep.subr.mxu0 0.0
    %420 = vmatpush1.msra.mxu0 %v351
    %421 = vmatprep.subr.mxu0 0.0
    %422 = vmatpush1.msra.mxu0 %v352
    %423 = vmatprep.subr.mxu0 0.0
    %424 = vmatpush1.msra.mxu0 %v353
    %425 = vmatprep.mubr.f32.mxu0 %v321
    %426 = vmatmul.mubr.f32.gmra.mrb[0].mxu0 %v320
    %v427 = vpop.f32.mrb[0].mxu0
    %v428 = vadd.f32 %v359, %v427
    %v429 = vpop.f32.mrb[0].mxu0
    %430 = vdwg.mxu0
    %v431 = vlaneseq
    %v432 = vand.u32 %v431, 127
    %v433 = vmax.f32 %v428, -20.0
    %v434 = vmin.f32 %v433, 2.0
    %vm435 = vcmp.ge.s32.totalorder %v432, 64
    %v436 = vsel %vm435, %v434, %v428
    %437 = vst [vmem:[%s7] sm:$0xff] %v436
    // Predicated region
    $region46: #{actor_forward.1} parent=1 // pred_check
      _
    $region47: #{actor_forward.1} parent=1 // pred_check_branch
      %439 = sbr.rel (0) target = $region49
    $region48: #{actor_forward.1} parent=1 // pred_region
      _
    $region49: #{actor_forward.1} parent=1 // pred_fallthru
      _
    // Predicated region
    $region50: #{actor_forward.1} parent=1 // pred_check
      _
    $region51: #{actor_forward.1} parent=1 // pred_check_branch
      %441 = sbr.rel (0) target = $region53
    $region52: #{actor_forward.1} parent=1 // pred_region
      _
    $region53: #{actor_forward.1} parent=1 // pred_fallthru
      _
    %442 = vsyncpa [#allocation3], 1
    %443 = vsyncpa [#allocation5], 1
    %444 = vsyncpa [#allocation8], 1

</llo_original>
